<compile_context>
chip_gen: v6e
topology: v6e:2x2x1
jax: 0.10.0
libtpu: 0.0.40
codegen_flags: <defaults>
</compile_context>

<pallas_src>
import functools

import jax
import jax.numpy as jnp
import numpy as np
from jax.experimental import pallas as pl
from jax.experimental.pallas import tpu as pltpu


def _yolo_decode_kernel(x_ref, cxcy_ref, code_ref, scale_ref, out_ref):
    """Decode one (batch, HW-tile) block for all anchors at once.

    x_ref     : VMEM (1, A*C5, T) raw predictions (channel-major, lane-dense)
    cxcy_ref  : VMEM (2, T)       row 0 = cx, row 1 = cy grid offsets
    code_ref  : VMEM (A*C5, 1)    int32 channel-within-anchor index (row % C5)
    scale_ref : VMEM (A*C5, 1)    anchor w/h on the w/h rows, 1.0 elsewhere
    out_ref   : VMEM (1, A*C5, T) decoded output
    """
    x = x_ref[0].astype(jnp.float32)          # (A*C5, T); upcast if bf16 input
    code = code_ref[...]                      # (A*C5, 1) int32
    scale = scale_ref[...]                    # (A*C5, 1) f32

    is_x = code == 0
    is_y = code == 1
    is_wh = jnp.logical_or(code == 2, code == 3)

    # sigmoid(x) = 0.5*tanh(0.5*x) + 0.5  -> single EUP op per element.
    sig = 0.5 * jnp.tanh(0.5 * x) + 0.5
    # Additive grid offsets: cx on the x rows, cy on the y rows, 0 elsewhere.
    offset = (jnp.where(is_x, cxcy_ref[0:1, :], 0.0)
              + jnp.where(is_y, cxcy_ref[1:2, :], 0.0))
    # exp on the full tile (rides the free EUP slot while HBM/store-bound);
    # scale is 1.0 on non-w/h rows so no inf*0 NaNs can leak past the select.
    wh = jnp.exp(x) * scale

    # Single unmasked full-tile store per grid step.
    out_ref[0] = jnp.where(is_wh, wh, sig + offset).astype(out_ref.dtype)


def _choose_hw_tile(hw):
    """Pick a lane-tile for the HW axis.

    Multiple of 128 (unmasked stores), roughly half the map so there are at
    least 2 HW steps (pipeline depth; both v7x TensorCores busy even at B=1),
    capped at 2048 lanes (per-step VMEM stays tiny on every generation).
    """
    if hw <= 128:
        return hw                           # full (possibly <128) dim, 1 block
    half = -(-((hw + 1) // 2) // 128) * 128   # ceil(hw/2) rounded up to 128
    return min(2048, half)


def yolo_layer_forward(x, anchors, num_classes, image_shape, num_anchors=3,
                       *, out_dtype=jnp.float32, lane_dense_output=False):
    """JAX/Pallas equivalent of YoloLayer.forward.

    x: (B, num_anchors*(num_classes+5), H, W) in NCHW, like PyTorch.
    Returns (prediction, scaled_anchors). prediction is (B, A, H, W, C5) by
    default, or the lane-dense (B, A*C5, H*W) kernel layout when
    lane_dense_output=True (preferred for a fused pipeline).
    """
    B, C, H, W = x.shape
    C5 = num_classes + 5
    assert C == num_anchors * C5
    HW = H * W
    AC5 = num_anchors * C5
    stride = image_shape[1] / W

    scaled_anchors = jnp.asarray(anchors, dtype=jnp.float32) / jnp.float32(stride)

    # Lane-dense view: channels on sublanes, flattened spatial dim on lanes.
    x_r = x.reshape(B, AC5, HW)

    # Tiny (2, HW) grid-offset slab: row 0 = cx, row 1 = cy.
    cx = jnp.broadcast_to(jnp.arange(W, dtype=jnp.float32)[None, :], (H, W))
    cy = jnp.broadcast_to(jnp.arange(H, dtype=jnp.float32)[:, None], (H, W))
    cxcy = jnp.stack([cx.reshape(HW), cy.reshape(HW)], axis=0)        # (2, HW)

    # Tiny per-row constants: channel code (row % C5) and anchor w/h scale.
    code_rows = jnp.tile(jnp.arange(C5, dtype=jnp.int32), num_anchors)
    code_rows = code_rows.reshape(AC5, 1)
    scale_rows = jnp.ones((num_anchors, C5), jnp.float32)
    scale_rows = scale_rows.at[:, 2].set(scaled_anchors[:, 0])
    scale_rows = scale_rows.at[:, 3].set(scaled_anchors[:, 1])
    scale_rows = scale_rows.reshape(AC5, 1)

    tile_hw = _choose_hw_tile(HW)
    n_hw = pl.cdiv(HW, tile_hw)

    out_dtype = jnp.dtype(out_dtype)
    # Alias the dead reshaped-input buffer as the output when dtypes match:
    # avoids allocating a second (B, A*C5, HW) HBM buffer (XLA copy-inserts
    # only if the operand cannot be reused, so this is always correct).
    alias = {0: 0} if out_dtype == x_r.dtype else {}

    out = pl.pallas_call(
        _yolo_decode_kernel,
        out_shape=jax.ShapeDtypeStruct((B, AC5, HW), out_dtype),
        grid=(B, n_hw),
        in_specs=[
            pl.BlockSpec((1, AC5, tile_hw), lambda b, t: (b, 0, t)),  # x block
            pl.BlockSpec((2, tile_hw), lambda b, t: (0, t)),          # cx/cy
            pl.BlockSpec((AC5, 1), lambda b, t: (0, 0)),              # row code
            pl.BlockSpec((AC5, 1), lambda b, t: (0, 0)),              # row scale
        ],
        out_specs=pl.BlockSpec((1, AC5, tile_hw), lambda b, t: (b, 0, t)),
        input_output_aliases=alias,
        compiler_params=pltpu.CompilerParams(
            dimension_semantics=("parallel", "parallel")),
    )(x_r, cxcy, code_rows, scale_rows)

    if lane_dense_output:
        return out, scaled_anchors

    # TODO(synk): in a fused pipeline the consumer should read the lane-dense
    # (B, A*C5, HW) output directly; this single XLA transpose exists only to
    # reproduce the PyTorch (B, A, H, W, C5) return layout.
    prediction = jnp.transpose(out.reshape(B, num_anchors, C5, H, W),
                               (0, 1, 3, 4, 2))
    return prediction, scaled_anchors


def _yolo_reference(x, anchors, num_classes, image_shape, num_anchors=3):
    """Pure numpy reference mirroring the PyTorch forward exactly."""
    x = np.asarray(x, dtype=np.float32)
    B, C, H, W = x.shape
    C5 = num_classes + 5
    stride = image_shape[1] / W
    sa = np.asarray(anchors, np.float32) / stride
    pred = x.reshape(B, num_anchors, C5, H, W).transpose(0, 1, 3, 4, 2)
    cx = np.tile(np.arange(W), (H, 1)).reshape(1, 1, H, W).astype(np.float32)
    cy = np.tile(np.arange(H), (W, 1)).T.reshape(1, 1, H, W).astype(np.float32)
    sig = 1.0 / (1.0 + np.exp(-pred))
    bx = sig[..., 0] + cx
    by = sig[..., 1] + cy
    bw = sa[:, 0].reshape(1, num_anchors, 1, 1) * np.exp(pred[..., 2])
    bh = sa[:, 1].reshape(1, num_anchors, 1, 1) * np.exp(pred[..., 3])
    obj = sig[..., 4]
    cls = sig[..., 5:]
    out = np.concatenate(
        [bx[..., None], by[..., None], bw[..., None], bh[..., None],
         obj[..., None], cls], axis=4)
    return out, sa


if __name__ == "__main__":
    # Small, deterministic config: 3 classes -> C5 = 8 channels per anchor,
    # 3 anchors -> 24 input channels, 16x16 feature map, batch 2.
    num_classes = 3
    num_anchors = 3
    anchors = ((10.0, 13.0), (16.0, 30.0), (33.0, 23.0))
    image_shape = (3, 416, 416)     # stride = 416 / 16 = 26

    B, H, W = 2, 16, 16
    C5 = num_classes + 5
    key = jax.random.PRNGKey(0)
    x = jax.random.normal(key, (B, num_anchors * C5, H, W), dtype=jnp.float32)

    fwd = jax.jit(functools.partial(
        yolo_layer_forward, anchors=anchors, num_classes=num_classes,
        image_shape=image_shape, num_anchors=num_anchors))
    prediction, scaled_anchors = fwd(x)
    prediction = jax.block_until_ready(prediction)
    scaled_anchors = jax.block_until_ready(scaled_anchors)

    # Check against a pure-numpy reference of the PyTorch forward.
    ref_pred, ref_sa = _yolo_reference(
        np.asarray(x), anchors, num_classes, image_shape,
        num_anchors=num_anchors)
    assert prediction.shape == (B, num_anchors, H, W, C5)
    np.testing.assert_allclose(np.asarray(prediction), ref_pred,
                               rtol=1e-5, atol=1e-5)
    np.testing.assert_allclose(np.asarray(scaled_anchors), ref_sa,
                               rtol=1e-6, atol=1e-6)

    print("KERNEL_OK")
</pallas_src>

<mosaic_0001>
module attributes {stable_mosaic.version = 11 : i64} {
  func.func @_yolo_decode_kernel(%arg0: i32, %arg1: i32, %arg2: memref<1x24x128xf32, #tpu.memory_space<vmem>>, %arg3: memref<2x128xf32, #tpu.memory_space<vmem>>, %arg4: memref<24x1xi32, #tpu.memory_space<vmem>>, %arg5: memref<24x1xf32, #tpu.memory_space<vmem>>, %arg6: memref<1x24x128xf32, #tpu.memory_space<vmem>>) attributes {dimension_semantics = [#tpu.dimension_semantics<parallel>, #tpu.dimension_semantics<parallel>], iteration_bounds = array<i64: 2, 2>, scalar_prefetch = 0 : i64, scratch_operands = 0 : i64, tpu.core_type = #tpu.core_type<tc>, window_params = [{transform_indices = @transform_0, window_bounds = array<i64: 1, 24, 128>}, {transform_indices = @transform_1, window_bounds = array<i64: 2, 128>}, {pipeline_mode = #tpu.pipeline_mode<synchronous>, transform_indices = @transform_2, window_bounds = array<i64: 24, 1>}, {pipeline_mode = #tpu.pipeline_mode<synchronous>, transform_indices = @transform_3, window_bounds = array<i64: 24, 1>}, {transform_indices = @transform_4, window_bounds = array<i64: 1, 24, 128>}]} {
    %c0 = arith.constant 0 : index
    %c0_0 = arith.constant 0 : index
    %c0_1 = arith.constant 0 : index
    %0 = vector.load %arg2[%c0, %c0_0, %c0_1] : memref<1x24x128xf32, #tpu.memory_space<vmem>>, vector<1x24x128xf32>
    %1 = vector.shape_cast %0 : vector<1x24x128xf32> to vector<24x128xf32>
    %c0_2 = arith.constant 0 : index
    %c0_3 = arith.constant 0 : index
    %2 = vector.load %arg4[%c0_2, %c0_3] : memref<24x1xi32, #tpu.memory_space<vmem>>, vector<24x1xi32>
    %c0_4 = arith.constant 0 : index
    %c0_5 = arith.constant 0 : index
    %3 = vector.load %arg5[%c0_4, %c0_5] : memref<24x1xf32, #tpu.memory_space<vmem>>, vector<24x1xf32>
    %c0_i32 = arith.constant 0 : i32
    %4 = vector.broadcast %c0_i32 : i32 to vector<24x1xi32>
    %5 = arith.cmpi eq, %2, %4 : vector<24x1xi32>
    %c1_i32 = arith.constant 1 : i32
    %6 = vector.broadcast %c1_i32 : i32 to vector<24x1xi32>
    %7 = arith.cmpi eq, %2, %6 : vector<24x1xi32>
    %c2_i32 = arith.constant 2 : i32
    %8 = vector.broadcast %c2_i32 : i32 to vector<24x1xi32>
    %9 = arith.cmpi eq, %2, %8 : vector<24x1xi32>
    %c3_i32 = arith.constant 3 : i32
    %10 = vector.broadcast %c3_i32 : i32 to vector<24x1xi32>
    %11 = arith.cmpi eq, %2, %10 : vector<24x1xi32>
    %12 = arith.ori %9, %11 : vector<24x1xi1>
    %cst = arith.constant 5.000000e-01 : f32
    %13 = vector.broadcast %cst : f32 to vector<24x128xf32>
    %14 = arith.mulf %13, %1 : vector<24x128xf32>
    %15 = math.tanh %14 : vector<24x128xf32>
    %cst_6 = arith.constant 5.000000e-01 : f32
    %16 = vector.broadcast %cst_6 : f32 to vector<24x128xf32>
    %17 = arith.mulf %16, %15 : vector<24x128xf32>
    %cst_7 = arith.constant 5.000000e-01 : f32
    %18 = vector.broadcast %cst_7 : f32 to vector<24x128xf32>
    %19 = arith.addf %17, %18 : vector<24x128xf32>
    %c0_8 = arith.constant 0 : index
    %c0_9 = arith.constant 0 : index
    %20 = vector.load %arg3[%c0_8, %c0_9] : memref<2x128xf32, #tpu.memory_space<vmem>>, vector<1x128xf32>
    %cst_10 = arith.constant 0.000000e+00 : f32
    %21 = vector.shape_cast %5 : vector<24x1xi1> to vector<24x1xi1>
    %22 = vector.broadcast %21 : vector<24x1xi1> to vector<24x128xi1>
    %23 = vector.shape_cast %20 : vector<1x128xf32> to vector<1x128xf32>
    %24 = vector.broadcast %23 : vector<1x128xf32> to vector<24x128xf32>
    %25 = vector.broadcast %cst_10 : f32 to vector<24x128xf32>
    %26 = arith.select %22, %24, %25 : vector<24x128xi1>, vector<24x128xf32>
    %c1 = arith.constant 1 : index
    %c0_11 = arith.constant 0 : index
    %27 = vector.load %arg3[%c1, %c0_11] : memref<2x128xf32, #tpu.memory_space<vmem>>, vector<1x128xf32>
    %cst_12 = arith.constant 0.000000e+00 : f32
    %28 = vector.shape_cast %7 : vector<24x1xi1> to vector<24x1xi1>
    %29 = vector.broadcast %28 : vector<24x1xi1> to vector<24x128xi1>
    %30 = vector.shape_cast %27 : vector<1x128xf32> to vector<1x128xf32>
    %31 = vector.broadcast %30 : vector<1x128xf32> to vector<24x128xf32>
    %32 = vector.broadcast %cst_12 : f32 to vector<24x128xf32>
    %33 = arith.select %29, %31, %32 : vector<24x128xi1>, vector<24x128xf32>
    %34 = arith.addf %26, %33 : vector<24x128xf32>
    %35 = math.exp %1 : vector<24x128xf32>
    %36 = vector.broadcast %3 : vector<24x1xf32> to vector<24x128xf32>
    %37 = arith.mulf %35, %36 : vector<24x128xf32>
    %38 = arith.addf %19, %34 : vector<24x128xf32>
    %39 = vector.shape_cast %12 : vector<24x1xi1> to vector<24x1xi1>
    %40 = vector.broadcast %39 : vector<24x1xi1> to vector<24x128xi1>
    %41 = arith.select %40, %37, %38 : vector<24x128xi1>, vector<24x128xf32>
    %c0_13 = arith.constant 0 : index
    %c0_14 = arith.constant 0 : index
    %c0_15 = arith.constant 0 : index
    %42 = vector.load %arg6[%c0_13, %c0_14, %c0_15] : memref<1x24x128xf32, #tpu.memory_space<vmem>>, vector<1x24x128xf32>
    %43 = vector.shape_cast %42 : vector<1x24x128xf32> to vector<24x128xf32>
    %44 = vector.shape_cast %41 : vector<24x128xf32> to vector<1x24x128xf32>
    tpu.vector_store %arg6[%c0_13, %c0_14, %c0_15], %44 {strides = array<i32>} : memref<1x24x128xf32, #tpu.memory_space<vmem>>, vector<1x24x128xf32>,
    return
  }
  func.func @transform_0(%arg0: i32, %arg1: i32) -> (i32, i32, i32) {
    %c0_i32 = arith.constant 0 : i32
    %c0_i32_0 = arith.constant 0 : i32
    return %arg0, %c0_i32, %arg1 : i32, i32, i32
  }
  func.func @transform_1(%arg0: i32, %arg1: i32) -> (i32, i32) {
    %c0_i32 = arith.constant 0 : i32
    %c0_i32_0 = arith.constant 0 : i32
    return %c0_i32, %arg1 : i32, i32
  }
  func.func @transform_2(%arg0: i32, %arg1: i32) -> (i32, i32) {
    %c0_i32 = arith.constant 0 : i32
    %c0_i32_0 = arith.constant 0 : i32
    %c0_i32_1 = arith.constant 0 : i32
    return %c0_i32, %c0_i32_0 : i32, i32
  }
  func.func @transform_3(%arg0: i32, %arg1: i32) -> (i32, i32) {
    %c0_i32 = arith.constant 0 : i32
    %c0_i32_0 = arith.constant 0 : i32
    %c0_i32_1 = arith.constant 0 : i32
    return %c0_i32, %c0_i32_0 : i32, i32
  }
  func.func @transform_4(%arg0: i32, %arg1: i32) -> (i32, i32, i32) {
    %c0_i32 = arith.constant 0 : i32
    %c0_i32_0 = arith.constant 0 : i32
    return %arg0, %c0_i32, %arg1 : i32, i32, i32
  }
}

</mosaic_0001>

<llo_original>
// kernel: tile.0
$region0: #{tile.0}
  %s0 = inlined_call_operand.vmem [shape: s32[3,8], index: 0, kind: input, shape index: {}]
  %s1 = inlined_call_operand.vmem [shape: s32[24,1], index: 1, kind: output, shape index: {}]
  $region1: #{tile.0} parent=0
    #allocation0 [shape = 'u8[4096]{0}', space=vmem, size = 0x1000, scoped, tag = 'scoped mem for input reshape']
    %s3 = sshll.u32 1, 4
    %s4 = ssub.s32 %s3, 1
    %v5 = vld [vmem:[%s0] sm:%s4]
    %6 = vst [vmem:[#allocation0] sm:%s4] %v5
    %v7 = vld [vmem:[#allocation0] sm:$0x7]
    %vm8 = vcmask 7168
    %9 = vst.msk [vmem:[%s1] ss:$8 sm:$0x7] %vm8, %v7
    %v10 = vld [vmem:[#allocation0] sm:$0x7]
    %11 = vrot.lane.b32.xlu0 %v10, 127
    %v12 = vpop.permute.xlu0 %11
    %vm13 = vcmask 7168
    %s14 = scalar_lea.vmem %s1, 1
    %15 = vst.msk [vmem:[%s14] ss:$8 sm:$0x7] %vm13, %v12
    %v16 = vld [vmem:[#allocation0] sm:$0x7]
    %17 = vrot.lane.b32.xlu0 %v16, 126
    %v18 = vpop.permute.xlu0 %17
    %vm19 = vcmask 7168
    %s20 = scalar_lea.vmem %s1, 2
    %21 = vst.msk [vmem:[%s20] ss:$8 sm:$0x7] %vm19, %v18
    %v22 = vld [vmem:[#allocation0] sm:$0x7]
    %23 = vrot.lane.b32.xlu0 %v22, 125
    %v24 = vpop.permute.xlu0 %23
    %vm25 = vcmask 7168
    %s26 = scalar_lea.vmem %s1, 3
    %27 = vst.msk [vmem:[%s26] ss:$8 sm:$0x7] %vm25, %v24
    %v28 = vld [vmem:[#allocation0] sm:$0x7]
    %29 = vrot.lane.b32.xlu0 %v28, 124
    %v30 = vpop.permute.xlu0 %29
    %vm31 = vcmask 7168
    %s32 = scalar_lea.vmem %s1, 4
    %33 = vst.msk [vmem:[%s32] ss:$8 sm:$0x7] %vm31, %v30
    %v34 = vld [vmem:[#allocation0] sm:$0x7]
    %35 = vrot.lane.b32.xlu0 %v34, 123
    %v36 = vpop.permute.xlu0 %35
    %vm37 = vcmask 7168
    %s38 = scalar_lea.vmem %s1, 5
    %39 = vst.msk [vmem:[%s38] ss:$8 sm:$0x7] %vm37, %v36
    %v40 = vld [vmem:[#allocation0] sm:$0x7]
    %41 = vrot.lane.b32.xlu0 %v40, 122
    %v42 = vpop.permute.xlu0 %41
    %vm43 = vcmask 7168
    %s44 = scalar_lea.vmem %s1, 6
    %45 = vst.msk [vmem:[%s44] ss:$8 sm:$0x7] %vm43, %v42
    %v46 = vld [vmem:[#allocation0] sm:$0x7]
    %47 = vrot.lane.b32.xlu0 %v46, 121
    %v48 = vpop.permute.xlu0 %47
    %vm49 = vcmask 7168
    %s50 = scalar_lea.vmem %s1, 7
    %51 = vst.msk [vmem:[%s50] ss:$8 sm:$0x7] %vm49, %v48

// kernel: yolo_layer_forward.1
$region0: #{yolo_layer_forward.1}
  #allocation0 [shape = 'u32[]', space=smem, size = 0x4, offset = 0x4, fixed_abs, tag = 'smem constant byte address 0x4 - core index']
  #allocation1 [shape = 'u32[144,128]{1,0:T(1,128)}', space=vmem, size = 0x12000, scoped, tag = 'internal scratch']
  %s0 = inlined_call_operand.vmem [shape: f32[2,24,256], index: 0, kind: input, shape index: {}, may-alias: {0,4}]
  %s1 = inlined_call_operand.vmem [shape: f32[2,256], index: 1, kind: input, shape index: {}]
  %s2 = inlined_call_operand.vmem [shape: s32[24,1], index: 2, kind: input, shape index: {}]
  %s3 = inlined_call_operand.vmem [shape: f32[24,1], index: 3, kind: input, shape index: {}]
  %s4 = inlined_call_operand.vmem [shape: f32[2,24,256], index: 4, kind: output, shape index: {}, may-alias: {0,4}]
  %s5 = sld [smem:[#allocation0]]
  $region121: #{yolo_layer_forward.1} parent=0
    _
  %s7 = ssub.s32 1, %s5
  %s8 = scalar_select 0, %s7, %s5
  $region1: #{yolo_layer_forward.1} parent=0
    #allocation2 [shape = 'u8[24576]{0}', space=vmem, size = 0x6000, scoped, tag = 'input window, operand 0']
    #allocation3 [shape = 'u8[24576]{0}', space=vmem, size = 0x6000, scoped, tag = 'output window, operand 0']
    loop: start=0, step=1, limit=6
    $region2: #{yolo_layer_forward.1} parent=1 // loop_pre_header
      _
    $region3: #{yolo_layer_forward.1} parent=1 // loop_header
      %s10 = sphi 0, %s14
      %p11 = scmp.ge.s32.totalorder %s10, 6
      %s17 = sphi 0, %s29
      %s18 = sphi 0, %s25
      %s19 = sphi 0, %s17
      %s20 = sphi 0, %s18
      %s21 = sphi 0, %s19
      %s22 = sphi 0, %s20
      %s34 = sphi 0, %s36
      %s37 = sphi 0, %s34
      %s38 = sphi 0, %s37
      %s54 = sphi 0, %s38
      %s60 = sphi 0, %s62
      %s63 = sphi 0, %s60
      %s64 = sphi 0, %s63
      %s80 = sphi 0, %s64
      %s84 = sphi 0, %s84
      %s86 = sphi 0, %s84
      %s87 = sphi 0, %s86
      %s101 = sphi 0, %s87
      %s105 = sphi 0, %s105
      %s107 = sphi 0, %s105
      %s108 = sphi 0, %s107
      %s122 = sphi 0, %s108
      %s130 = sphi 0, %s132
      %s133 = sphi 0, %s130
      %s134 = sphi 0, %s133
      %s150 = sphi 0, %s134
    $region4: #{yolo_layer_forward.1} parent=1 // loop_header_branch
      %13 = sbr.rel (%p11) target = $region8
    $region5: #{yolo_layer_forward.1} parent=1 // loop_body
      %s15 = ssub.s32 %s10, 1
      %s16 = ssub.s32 %s10, 2
      %s23 = sadd.s32 1, %s18
      %p24 = scmp.ge.s32.totalorder %s23, 2
      %s25 = scalar_select %p24, 0, %s23
      %s26 = sadd.s32 1, %s17
      %s27 = scalar_select %p24, %s26, %s17
      %p28 = scmp.ge.s32.totalorder %s27, 2
      %s29 = scalar_select %p28, 0, %s27
      %s30 = ssub.s32 %s17, %s29
      %s31 = ssub.s32 %s18, %s25
      %s32 = sor.u32 %s30, %s31
      %p33 = scmp.eq.s32.totalorder %s32, 0
      %s35 = sadd.s32 %s34, 1
      %s36 = scalar_select %p33, %s34, %s35
      %p39 = pneg %p33
      %p40 = scmp.eq.s32.totalorder %s10, 3
      %p41 = por %p39, %p40
      %p42 = scmp.ne.s32.totalorder %s34, %s37
      %p43 = scmp.eq.s32.totalorder %s10, 0
      %p44 = por %p42, %p43
      %p45 = scmp.ne.s32.totalorder %s34, %s37
      %p46 = scmp.eq.s32.totalorder %s15, 3
      %p47 = por %p45, %p46
      %p48 = scmp.ne.s32.totalorder %s37, %s38
      %p49 = scmp.eq.s32.totalorder %s15, 0
      %p50 = por %p48, %p49
      %p51 = scmp.ne.s32.totalorder %s37, %s38
      %p52 = scmp.eq.s32.totalorder %s16, 3
      %p53 = por %p51, %p52
      %p55 = scmp.ne.s32.totalorder %s38, %s54
      %p56 = scmp.eq.s32.totalorder %s16, 0
      %p57 = por %p55, %p56
      %s58 = ssub.s32 %s18, %s25
      %p59 = scmp.eq.s32.totalorder %s58, 0
      %s61 = sadd.s32 %s60, 1
      %s62 = scalar_select %p59, %s60, %s61
      %p65 = pneg %p59
      %p66 = scmp.eq.s32.totalorder %s10, 3
      %p67 = por %p65, %p66
      %p68 = scmp.ne.s32.totalorder %s60, %s63
      %p69 = scmp.eq.s32.totalorder %s10, 0
      %p70 = por %p68, %p69
      %p71 = scmp.ne.s32.totalorder %s60, %s63
      %p72 = scmp.eq.s32.totalorder %s15, 3
      %p73 = por %p71, %p72
      %p74 = scmp.ne.s32.totalorder %s63, %s64
      %p75 = scmp.eq.s32.totalorder %s15, 0
      %p76 = por %p74, %p75
      %p77 = scmp.ne.s32.totalorder %s63, %s64
      %p78 = scmp.eq.s32.totalorder %s16, 3
      %p79 = por %p77, %p78
      %p81 = scmp.ne.s32.totalorder %s64, %s80
      %p82 = scmp.eq.s32.totalorder %s16, 0
      %p83 = por %p81, %p82
      %s85 = sadd.s32 %s84, 1
      %p88 = scmp.eq.s32.totalorder %s10, 3
      %p89 = scmp.ne.s32.totalorder %s84, %s86
      %p90 = scmp.eq.s32.totalorder %s10, 0
      %p91 = por %p89, %p90
      %p92 = scmp.ne.s32.totalorder %s84, %s86
      %p93 = scmp.eq.s32.totalorder %s15, 3
      %p94 = por %p92, %p93
      %p95 = scmp.ne.s32.totalorder %s86, %s87
      %p96 = scmp.eq.s32.totalorder %s15, 0
      %p97 = por %p95, %p96
      %p98 = scmp.ne.s32.totalorder %s86, %s87
      %p99 = scmp.eq.s32.totalorder %s16, 3
      %p100 = por %p98, %p99
      %p102 = scmp.ne.s32.totalorder %s87, %s101
      %p103 = scmp.eq.s32.totalorder %s16, 0
      %p104 = por %p102, %p103
      %s106 = sadd.s32 %s105, 1
      %p109 = scmp.eq.s32.totalorder %s10, 3
      %p110 = scmp.ne.s32.totalorder %s105, %s107
      %p111 = scmp.eq.s32.totalorder %s10, 0
      %p112 = por %p110, %p111
      %p113 = scmp.ne.s32.totalorder %s105, %s107
      %p114 = scmp.eq.s32.totalorder %s15, 3
      %p115 = por %p113, %p114
      %p116 = scmp.ne.s32.totalorder %s107, %s108
      %p117 = scmp.eq.s32.totalorder %s15, 0
      %p118 = por %p116, %p117
      %p119 = scmp.ne.s32.totalorder %s107, %s108
      %p120 = scmp.eq.s32.totalorder %s16, 3
      %p121 = por %p119, %p120
      %p123 = scmp.ne.s32.totalorder %s108, %s122
      %p124 = scmp.eq.s32.totalorder %s16, 0
      %p125 = por %p123, %p124
      %s126 = ssub.s32 %s17, %s29
      %s127 = ssub.s32 %s18, %s25
      %s128 = sor.u32 %s126, %s127
      %p129 = scmp.eq.s32.totalorder %s128, 0
      %s131 = sadd.s32 %s130, 1
      %s132 = scalar_select %p129, %s130, %s131
      %p135 = pneg %p129
      %p136 = scmp.eq.s32.totalorder %s10, 3
      %p137 = por %p135, %p136
      %p138 = scmp.ne.s32.totalorder %s130, %s133
      %p139 = scmp.eq.s32.totalorder %s10, 0
      %p140 = por %p138, %p139
      %p141 = scmp.ne.s32.totalorder %s130, %s133
      %p142 = scmp.eq.s32.totalorder %s15, 3
      %p143 = por %p141, %p142
      %p144 = scmp.ne.s32.totalorder %s133, %s134
      %p145 = scmp.eq.s32.totalorder %s15, 0
      %p146 = por %p144, %p145
      %p147 = scmp.ne.s32.totalorder %s133, %s134
      %p148 = scmp.eq.s32.totalorder %s16, 3
      %p149 = por %p147, %p148
      %p151 = scmp.ne.s32.totalorder %s134, %s150
      %p152 = scmp.eq.s32.totalorder %s16, 0
      %p153 = por %p151, %p152
      %p154 = scmp.le.s32.totalorder 1, %s10
      %p155 = scmp.lt.s32.totalorder %s10, 5
      %p156 = pnand %p154, %p155
      %p157 = pneg %p156
      // Predicated region
      $region9: #{yolo_layer_forward.1} parent=5 // pred_check
        _
      $region10: #{yolo_layer_forward.1} parent=5 // pred_check_branch
        %159 = sbr.rel (%p156) target = $region12
      $region11: #{yolo_layer_forward.1} parent=5 // pred_region
        %s160 = ssub.s32 %s10, 1
        // Predicated region
        $region13: #{yolo_layer_forward.1} parent=11 // pred_check
          %p161 = pneg %p97
        $region14: #{yolo_layer_forward.1} parent=11 // pred_check_branch
          %163 = sbr.rel (%p161) target = $region16
        $region15: #{yolo_layer_forward.1} parent=11 // pred_region
          _
        $region16: #{yolo_layer_forward.1} parent=11 // pred_fallthru
          _
        // Predicated region
        $region17: #{yolo_layer_forward.1} parent=11 // pred_check
          %p164 = pneg %p118
        $region18: #{yolo_layer_forward.1} parent=11 // pred_check_branch
          %166 = sbr.rel (%p164) target = $region20
        $region19: #{yolo_layer_forward.1} parent=11 // pred_region
          _
        $region20: #{yolo_layer_forward.1} parent=11 // pred_fallthru
          _
      $region12: #{yolo_layer_forward.1} parent=5 // pred_fallthru
        _
      %p167 = scmp.lt.s32.totalorder %s10, 4
      // Predicated region
      $region21: #{yolo_layer_forward.1} parent=5 // pred_check
        %p168 = pneg %p167
      $region22: #{yolo_layer_forward.1} parent=5 // pred_check_branch
        %170 = sbr.rel (%p168) target = $region24
      $region23: #{yolo_layer_forward.1} parent=5 // pred_region
        // Predicated region
        $region25: #{yolo_layer_forward.1} parent=23 // pred_check
          %p171 = pneg %p44
        $region26: #{yolo_layer_forward.1} parent=23 // pred_check_branch
          %173 = sbr.rel (%p171) target = $region28
        $region27: #{yolo_layer_forward.1} parent=23 // pred_region
          %s174 = sand.u32 %s34, 1
          %s175 = sand.u32 %s34, 1
          %s176 = smul.addr %s175, 24
          %s177 = scalar_lea.vmem [#allocation2], %s176
          %s178 = smul.addr %s17, 6
          %s179 = sadd.s32 %s18, %s178
          %s180 = smul.addr %s179, 8
          %s181 = scalar_lea.vmem %s0, %s180
          // Predicated region
          $region29: #{yolo_layer_forward.1} parent=27 // pred_check
            _
          $region30: #{yolo_layer_forward.1} parent=27 // pred_check_branch
            %183 = sbr.rel (0) target = $region32
          $region31: #{yolo_layer_forward.1} parent=27 // pred_region
            // Predicated region
            $region33: #{yolo_layer_forward.1} parent=31 // pred_check
              _
            $region34: #{yolo_layer_forward.1} parent=31 // pred_check_branch
              %185 = sbr.rel (0) target = $region36
            $region35: #{yolo_layer_forward.1} parent=31 // pred_region
              // Predicated region
              $region48: #{yolo_layer_forward.1} parent=35 // pred_check
                _
              $region49: #{yolo_layer_forward.1} parent=35 // pred_check_branch
                %205 = sbr.rel (0) target = $region51
              $region50: #{yolo_layer_forward.1} parent=35 // pred_region
                loop: start=0, step=1, limit=1
                $region52: #{yolo_layer_forward.1} parent=50 // loop_pre_header
                  _
                $region53: #{yolo_layer_forward.1} parent=50 // loop_header
                  %s207 = sphi 0, %s211
                  %p208 = scmp.ge.s32.totalorder %s207, 1
                  %s212 = sphi %s181, %s181
                  %s213 = sphi %s177, %s177
                $region54: #{yolo_layer_forward.1} parent=50 // loop_header_branch
                  %210 = sbr.rel (%p208) target = $region58
                $region55: #{yolo_layer_forward.1} parent=50 // loop_body
                  %v214 = vld [vmem:[%s212] sm:$0xff]
                  %215 = vst [vmem:[%s213] sm:$0xff] %v214
                  %v216 = vld [vmem:[%s212 + $0x10] sm:$0xff]
                  %217 = vst [vmem:[%s213 + $0x8] sm:$0xff] %v216
                  %v218 = vld [vmem:[%s212 + $0x20] sm:$0xff]
                  %219 = vst [vmem:[%s213 + $0x10] sm:$0xff] %v218
                $region56: #{yolo_layer_forward.1} parent=50 // loop_footer
                  %s211 = sadd.s32 1, %s207
                $region57: #{yolo_layer_forward.1} parent=50 // loop_footer_branch
                  %206 = sbr.rel target = $region53
                $region58: #{yolo_layer_forward.1} parent=50 // loop_exit
                  _
              $region51: #{yolo_layer_forward.1} parent=35 // pred_fallthru
                _
              // Predicated region
              $region59: #{yolo_layer_forward.1} parent=35 // pred_check
                _
              $region60: #{yolo_layer_forward.1} parent=35 // pred_check_branch
                %221 = sbr.rel target = $region62
              $region61: #{yolo_layer_forward.1} parent=35 // pred_region
                _
              $region62: #{yolo_layer_forward.1} parent=35 // pred_fallthru
                _
            $region36: #{yolo_layer_forward.1} parent=31 // pred_fallthru
              _
            // Predicated region
            $region37: #{yolo_layer_forward.1} parent=31 // pred_check
              _
            $region38: #{yolo_layer_forward.1} parent=31 // pred_check_branch
              %187 = sbr.rel target = $region40
            $region39: #{yolo_layer_forward.1} parent=31 // pred_region
              %s189 = ssub.s32 256, 1
              loop: start=0, step=1, limit=1
              $region41: #{yolo_layer_forward.1} parent=39 // loop_pre_header
                _
              $region42: #{yolo_layer_forward.1} parent=39 // loop_header
                %s191 = sphi 0, %s195
                %p192 = scmp.ge.s32.totalorder %s191, 1
                %s196 = sphi %s181, %s181
                %s197 = sphi %s177, %s177
              $region43: #{yolo_layer_forward.1} parent=39 // loop_header_branch
                %194 = sbr.rel (%p192) target = $region47
              $region44: #{yolo_layer_forward.1} parent=39 // loop_body
                %v198 = vld [vmem:[%s196] sm:%s189]
                %199 = vst [vmem:[%s197] sm:%s189] %v198
                %v200 = vld [vmem:[%s196 + $0x10] sm:%s189]
                %201 = vst [vmem:[%s197 + $0x8] sm:%s189] %v200
                %v202 = vld [vmem:[%s196 + $0x20] sm:%s189]
                %203 = vst [vmem:[%s197 + $0x10] sm:%s189] %v202
              $region45: #{yolo_layer_forward.1} parent=39 // loop_footer
                %s195 = sadd.s32 1, %s191
              $region46: #{yolo_layer_forward.1} parent=39 // loop_footer_branch
                %190 = sbr.rel target = $region42
              $region47: #{yolo_layer_forward.1} parent=39 // loop_exit
                _
            $region40: #{yolo_layer_forward.1} parent=31 // pred_fallthru
              _
          $region32: #{yolo_layer_forward.1} parent=27 // pred_fallthru
            _
          %222 = vnop
        $region28: #{yolo_layer_forward.1} parent=23 // pred_fallthru
          _
        // Predicated region
        $region63: #{yolo_layer_forward.1} parent=23 // pred_check
          %p223 = pneg %p70
        $region64: #{yolo_layer_forward.1} parent=23 // pred_check_branch
          %225 = sbr.rel (%p223) target = $region66
        $region65: #{yolo_layer_forward.1} parent=23 // pred_region
          %p226 = scmp.lt.s32.totalorder %s18, 1
          %s227 = scalar_select %p226, %s18, 1
          %s228 = smul.addr %s227, 2
          %s229 = scalar_lea.vmem %s1, %s228
        $region66: #{yolo_layer_forward.1} parent=23 // pred_fallthru
          _
      $region24: #{yolo_layer_forward.1} parent=5 // pred_fallthru
        _
      %p230 = scmp.le.s32.totalorder 1, %s10
      %p231 = scmp.lt.s32.totalorder %s10, 5
      %p232 = pnand %p230, %p231
      %p233 = pneg %p232
      // Predicated region
      $region67: #{yolo_layer_forward.1} parent=5 // pred_check
        _
      $region68: #{yolo_layer_forward.1} parent=5 // pred_check_branch
        %235 = sbr.rel (%p232) target = $region70
      $region69: #{yolo_layer_forward.1} parent=5 // pred_region
        %s236 = ssub.s32 %s10, 1
        %s237 = sand.u32 %s37, 1
        %s238 = sand.u32 %s37, 1
        %s239 = smul.addr %s238, 24
        %s240 = scalar_lea.vmem [#allocation2], %s239
        // Predicated region
        $region71: #{yolo_layer_forward.1} parent=69 // pred_check
          %p241 = pneg %p50
        $region72: #{yolo_layer_forward.1} parent=69 // pred_check_branch
          %243 = sbr.rel (%p241) target = $region74
        $region73: #{yolo_layer_forward.1} parent=69 // pred_region
          _
        $region74: #{yolo_layer_forward.1} parent=69 // pred_fallthru
          _
        %s244 = sand.u32 %s37, 1
        %s245 = sand.u32 %s37, 1
        %s246 = smul.addr %s245, 24
        %s247 = scalar_lea.vmem [#allocation2], %s246
        %p248 = pneg %p50
        %p249 = pneg %p47
        %p250 = scmp.lt.s32.totalorder %s20, 1
        %s251 = scalar_select %p250, %s20, 1
        %s252 = smul.addr %s251, 2
        %s253 = scalar_lea.vmem %s1, %s252
        %p254 = pneg %p76
        %p255 = pneg %p73
        %p256 = pneg %p97
        %p257 = pneg %p94
        %p258 = pneg %p118
        %p259 = pneg %p115
        %p260 = pneg %p146
        %p261 = pneg %p143
        %s262 = sand.u32 %s133, 1
        %s263 = sand.u32 %s133, 1
        %s264 = smul.addr %s263, 24
        %s265 = scalar_lea.vmem [#allocation3], %s264
        %p266 = scmp.lt.s32.totalorder %s20, 1
        %s267 = scalar_select %p266, %s20, 1
        %s268 = smul.addr %s267, 2
        %s269 = scalar_lea.vmem %s1, %s268
        %v270 = vld [vmem:[%s240] sm:$0xff]
        %v271 = vld [vmem:[%s240 + $0x8] sm:$0xff]
        %v272 = vld [vmem:[%s240 + $0x10] sm:$0xff]
        %v273 = vld [vmem:[%s2] sm:$0xff]
        %v274 = vld [vmem:[%s2 + $0x8] sm:$0xff]
        %v275 = vld [vmem:[%s2 + $0x10] sm:$0xff]
        %v276 = vld [vmem:[%s3] sm:$0xff]
        %v277 = vld [vmem:[%s3 + $0x8] sm:$0xff]
        %v278 = vld [vmem:[%s3 + $0x10] sm:$0xff]
        %vm279 = vcmp.eq.s32.totalorder %v273, 0
        %vm280 = vcmp.eq.s32.totalorder %v274, 0
        %vm281 = vcmp.eq.s32.totalorder %v275, 0
        %vm282 = vcmp.eq.s32.totalorder %v273, 1
        %vm283 = vcmp.eq.s32.totalorder %v274, 1
        %vm284 = vcmp.eq.s32.totalorder %v275, 1
        %vm285 = vcmp.eq.s32.totalorder %v273, 2
        %vm286 = vcmp.eq.s32.totalorder %v274, 2
        %vm287 = vcmp.eq.s32.totalorder %v275, 2
        %vm288 = vcmp.eq.s32.totalorder %v273, 3
        %vm289 = vcmp.eq.s32.totalorder %v274, 3
        %vm290 = vcmp.eq.s32.totalorder %v275, 3
        %vm291 = vmor %vm285, %vm288
        %vm292 = vmor %vm286, %vm289
        %vm293 = vmor %vm287, %vm290
        %v294 = vmul.f32 %v270, 0.5
        %v295 = vmul.f32 %v271, 0.5
        %v296 = vmul.f32 %v272, 0.5
        %v297 = vtanh.pop %v294
        %v298 = vtanh.pop %v295
        %v299 = vtanh.pop %v296
        %v300 = vmul.f32 %v297, 0.5
        %v301 = vmul.f32 %v298, 0.5
        %v302 = vmul.f32 %v299, 0.5
        %v303 = vadd.f32 %v300, 0.5
        %v304 = vadd.f32 %v301, 0.5
        %v305 = vadd.f32 %v302, 0.5
        %v306 = vld [vmem:[%s269] sm:$0x1]
        %v307 = vsel %vm279, 1, 0
        %v308 = vsel %vm280, 1, 0
        %v309 = vsel %vm281, 1, 0
        %310 = vset.pattern.permute.xlu0 0
        %311 = vperm.xlu0 %310, %v307
        %v312 = vpop.permute.xlu0 %311
        %313 = vset.pattern.permute.xlu0 0
        %314 = vperm.xlu0 %313, %v308
        %v315 = vpop.permute.xlu0 %314
        %316 = vset.pattern.permute.xlu0 0
        %317 = vperm.xlu0 %316, %v309
        %v318 = vpop.permute.xlu0 %317
        %vm319 = vcmp.eq.s32.totalorder %v312, 1
        %vm320 = vcmp.eq.s32.totalorder %v315, 1
        %vm321 = vcmp.eq.s32.totalorder %v318, 1
        %v322 = vlaneseq
        %v323 = vshrl.u32 %v322, 7
        %v324 = vsub.s32 0, %v323
        %v325 = vrot.slane %v306, %v324
        %v326 = vsel %vm319, %v325, 0.0
        %v327 = vsel %vm320, %v325, 0.0
        %v328 = vsel %vm321, %v325, 0.0
        %v329 = vld [vmem:[%s269 + $0x1] sm:$0x1]
        %v330 = vsel %vm282, 1, 0
        %v331 = vsel %vm283, 1, 0
        %v332 = vsel %vm284, 1, 0
        %333 = vset.pattern.permute.xlu0 0
        %334 = vperm.xlu0 %333, %v330
        %v335 = vpop.permute.xlu0 %334
        %336 = vset.pattern.permute.xlu0 0
        %337 = vperm.xlu0 %336, %v331
        %v338 = vpop.permute.xlu0 %337
        %339 = vset.pattern.permute.xlu0 0
        %340 = vperm.xlu0 %339, %v332
        %v341 = vpop.permute.xlu0 %340
        %vm342 = vcmp.eq.s32.totalorder %v335, 1
        %vm343 = vcmp.eq.s32.totalorder %v338, 1
        %vm344 = vcmp.eq.s32.totalorder %v341, 1
        %v345 = vlaneseq
        %v346 = vshrl.u32 %v345, 7
        %v347 = vsub.s32 0, %v346
        %v348 = vrot.slane %v329, %v347
        %v349 = vsel %vm342, %v348, 0.0
        %v350 = vsel %vm343, %v348, 0.0
        %v351 = vsel %vm344, %v348, 0.0
        %v352 = vadd.f32 %v326, %v349
        %v353 = vadd.f32 %v327, %v350
        %v354 = vadd.f32 %v328, %v351
        %v355 = vmul.f32 %v270, 1.442695
        %v356 = vpow.pop %v355
        %v357 = vmul.f32 %v271, 1.442695
        %v358 = vpow.pop %v357
        %v359 = vmul.f32 %v272, 1.442695
        %v360 = vpow.pop %v359
        %362 = vset.pattern.permute.xlu0 0
        %363 = vperm.xlu0 %362, %v276
        %v364 = vpop.permute.xlu0 %363
        %367 = vset.pattern.permute.xlu0 0
        %368 = vperm.xlu0 %367, %v277
        %v369 = vpop.permute.xlu0 %368
        %372 = vset.pattern.permute.xlu0 0
        %373 = vperm.xlu0 %372, %v278
        %v374 = vpop.permute.xlu0 %373
        %v376 = vmul.f32 %v356, %v364
        %v377 = vmul.f32 %v358, %v369
        %v378 = vmul.f32 %v360, %v374
        %v379 = vadd.f32 %v303, %v352
        %v380 = vadd.f32 %v304, %v353
        %v381 = vadd.f32 %v305, %v354
        %v382 = vsel %vm291, 1, 0
        %v383 = vsel %vm292, 1, 0
        %v384 = vsel %vm293, 1, 0
        %385 = vset.pattern.permute.xlu0 0
        %386 = vperm.xlu0 %385, %v382
        %v387 = vpop.permute.xlu0 %386
        %388 = vset.pattern.permute.xlu0 0
        %389 = vperm.xlu0 %388, %v383
        %v390 = vpop.permute.xlu0 %389
        %391 = vset.pattern.permute.xlu0 0
        %392 = vperm.xlu0 %391, %v384
        %v393 = vpop.permute.xlu0 %392
        %vm394 = vcmp.eq.s32.totalorder %v387, 1
        %vm395 = vcmp.eq.s32.totalorder %v390, 1
        %vm396 = vcmp.eq.s32.totalorder %v393, 1
        %v397 = vsel %vm394, %v376, %v379
        %v398 = vsel %vm395, %v377, %v380
        %v399 = vsel %vm396, %v378, %v381
        %400 = vst [vmem:[%s265] sm:$0xff] %v397
        %401 = vst [vmem:[%s265 + $0x8] sm:$0xff] %v398
        %402 = vst [vmem:[%s265 + $0x10] sm:$0xff] %v399
        %s403 = sand.u32 %s133, 1
        %s404 = sand.u32 %s133, 1
        %s405 = smul.addr %s404, 24
        %s406 = scalar_lea.vmem [#allocation3], %s405
        // Predicated region
        $region75: #{yolo_layer_forward.1} parent=69 // pred_check
          %p407 = pneg %p143
        $region76: #{yolo_layer_forward.1} parent=69 // pred_check_branch
          %409 = sbr.rel (%p407) target = $region78
        $region77: #{yolo_layer_forward.1} parent=69 // pred_region
          %s410 = smul.addr %s19, 6
          %s411 = sadd.s32 %s20, %s410
          %s412 = smul.addr %s411, 8
          %s413 = scalar_lea.vmem %s4, %s412
          // Predicated region
          $region79: #{yolo_layer_forward.1} parent=77 // pred_check
            _
          $region80: #{yolo_layer_forward.1} parent=77 // pred_check_branch
            %415 = sbr.rel (0) target = $region82
          $region81: #{yolo_layer_forward.1} parent=77 // pred_region
            // Predicated region
            $region83: #{yolo_layer_forward.1} parent=81 // pred_check
              _
            $region84: #{yolo_layer_forward.1} parent=81 // pred_check_branch
              %417 = sbr.rel (0) target = $region86
            $region85: #{yolo_layer_forward.1} parent=81 // pred_region
              // Predicated region
              $region98: #{yolo_layer_forward.1} parent=85 // pred_check
                _
              $region99: #{yolo_layer_forward.1} parent=85 // pred_check_branch
                %437 = sbr.rel (0) target = $region101
              $region100: #{yolo_layer_forward.1} parent=85 // pred_region
                loop: start=0, step=1, limit=1
                $region102: #{yolo_layer_forward.1} parent=100 // loop_pre_header
                  _
                $region103: #{yolo_layer_forward.1} parent=100 // loop_header
                  %s439 = sphi 0, %s443
                  %p440 = scmp.ge.s32.totalorder %s439, 1
                  %s444 = sphi %s406, %s406
                  %s445 = sphi %s413, %s413
                $region104: #{yolo_layer_forward.1} parent=100 // loop_header_branch
                  %442 = sbr.rel (%p440) target = $region108
                $region105: #{yolo_layer_forward.1} parent=100 // loop_body
                  %v446 = vld [vmem:[%s444] sm:$0xff]
                  %447 = vst [vmem:[%s445] sm:$0xff] %v446
                  %v448 = vld [vmem:[%s444 + $0x8] sm:$0xff]
                  %449 = vst [vmem:[%s445 + $0x10] sm:$0xff] %v448
                  %v450 = vld [vmem:[%s444 + $0x10] sm:$0xff]
                  %451 = vst [vmem:[%s445 + $0x20] sm:$0xff] %v450
                $region106: #{yolo_layer_forward.1} parent=100 // loop_footer
                  %s443 = sadd.s32 1, %s439
                $region107: #{yolo_layer_forward.1} parent=100 // loop_footer_branch
                  %438 = sbr.rel target = $region103
                $region108: #{yolo_layer_forward.1} parent=100 // loop_exit
                  _
              $region101: #{yolo_layer_forward.1} parent=85 // pred_fallthru
                _
              // Predicated region
              $region109: #{yolo_layer_forward.1} parent=85 // pred_check
                _
              $region110: #{yolo_layer_forward.1} parent=85 // pred_check_branch
                %453 = sbr.rel target = $region112
              $region111: #{yolo_layer_forward.1} parent=85 // pred_region
                _
              $region112: #{yolo_layer_forward.1} parent=85 // pred_fallthru
                _
            $region86: #{yolo_layer_forward.1} parent=81 // pred_fallthru
              _
            // Predicated region
            $region87: #{yolo_layer_forward.1} parent=81 // pred_check
              _
            $region88: #{yolo_layer_forward.1} parent=81 // pred_check_branch
              %419 = sbr.rel target = $region90
            $region89: #{yolo_layer_forward.1} parent=81 // pred_region
              %s421 = ssub.s32 256, 1
              loop: start=0, step=1, limit=1
              $region91: #{yolo_layer_forward.1} parent=89 // loop_pre_header
                _
              $region92: #{yolo_layer_forward.1} parent=89 // loop_header
                %s423 = sphi 0, %s427
                %p424 = scmp.ge.s32.totalorder %s423, 1
                %s428 = sphi %s406, %s406
                %s429 = sphi %s413, %s413
              $region93: #{yolo_layer_forward.1} parent=89 // loop_header_branch
                %426 = sbr.rel (%p424) target = $region97
              $region94: #{yolo_layer_forward.1} parent=89 // loop_body
                %v430 = vld [vmem:[%s428] sm:%s421]
                %431 = vst [vmem:[%s429] sm:%s421] %v430
                %v432 = vld [vmem:[%s428 + $0x8] sm:%s421]
                %433 = vst [vmem:[%s429 + $0x10] sm:%s421] %v432
                %v434 = vld [vmem:[%s428 + $0x10] sm:%s421]
                %435 = vst [vmem:[%s429 + $0x20] sm:%s421] %v434
              $region95: #{yolo_layer_forward.1} parent=89 // loop_footer
                %s427 = sadd.s32 1, %s423
              $region96: #{yolo_layer_forward.1} parent=89 // loop_footer_branch
                %422 = sbr.rel target = $region92
              $region97: #{yolo_layer_forward.1} parent=89 // loop_exit
                _
            $region90: #{yolo_layer_forward.1} parent=81 // pred_fallthru
              _
          $region82: #{yolo_layer_forward.1} parent=77 // pred_fallthru
            _
          %454 = vnop
        $region78: #{yolo_layer_forward.1} parent=69 // pred_fallthru
          _
      $region70: #{yolo_layer_forward.1} parent=5 // pred_fallthru
        _
      %p455 = scmp.le.s32.totalorder 2, %s10
      // Predicated region
      $region113: #{yolo_layer_forward.1} parent=5 // pred_check
        %p456 = pneg %p455
      $region114: #{yolo_layer_forward.1} parent=5 // pred_check_branch
        %458 = sbr.rel (%p456) target = $region116
      $region115: #{yolo_layer_forward.1} parent=5 // pred_region
        %s459 = ssub.s32 %s10, 2
        // Predicated region
        $region117: #{yolo_layer_forward.1} parent=115 // pred_check
          %p460 = pneg %p149
        $region118: #{yolo_layer_forward.1} parent=115 // pred_check_branch
          %462 = sbr.rel (%p460) target = $region120
        $region119: #{yolo_layer_forward.1} parent=115 // pred_region
          %s463 = sand.u32 %s134, 1
          %s464 = sand.u32 %s134, 1
          %s465 = smul.addr %s464, 24
          %s466 = scalar_lea.vmem [#allocation3], %s465
        $region120: #{yolo_layer_forward.1} parent=115 // pred_fallthru
          _
      $region116: #{yolo_layer_forward.1} parent=5 // pred_fallthru
        _
    $region6: #{yolo_layer_forward.1} parent=1 // loop_footer
      %s14 = sadd.s32 1, %s10
    $region7: #{yolo_layer_forward.1} parent=1 // loop_footer_branch
      %9 = sbr.rel target = $region3
    $region8: #{yolo_layer_forward.1} parent=1 // loop_exit
      _

</llo_original>
